<compile_context>
chip_gen: v7x
topology: tpu7x:2x2x1
jax: 0.10.0
libtpu: 0.0.40
codegen_flags: <defaults>
</compile_context>

<pallas_src>
from functools import partial

import jax
import jax.numpy as jnp
import numpy as np
from jax import lax
from jax.experimental import pallas as pl
from jax.experimental.pallas import tpu as pltpu

# ----- DelayLine "parameters" (deterministic, in-script config) -------------
SAMPLE_RATE = 100
DELAYS_SEC = [0.03, 0.05, 0.07]
MIX = 0.35
DELAY_SAMPLES = [round(d * SAMPLE_RATE) for d in DELAYS_SEC]  # [3, 5, 7]

_LANE = 128                         # lanes per folded row
_SUB = 8                            # f32 sublane tile height
_MIN_TILE = _SUB * _LANE            # 1024 samples = one (8,128) vreg
_MAX_VMEM_LIMIT = 96 * 1024 * 1024  # cap even on 128 MiB parts (v5e/v6e)
_FALLBACK_VMEM_CAP = 64 * 1024 * 1024  # assume the smallest (v7x) if query fails


def _round_up(n, m):
    return ((n + m - 1) // m) * m


def _vmem_limit_bytes():
    cap = _FALLBACK_VMEM_CAP
    try:
        cap = int(pltpu.get_tpu_info().vmem_capacity_bytes)
    except Exception:
        pass
    # ~48 MiB on v7x, 96 MiB on v5e/v6e.
    return min((cap * 3) // 4, _MAX_VMEM_LIMIT)


def _tile_taps(x_blk, halo_row, *, mix, delays):
    """Per-tap mixed (mix*wet + (1-mix)*dry) signals for one (R, 128) tile.

    halo_row is the previous 128 samples of the folded signal (row base-1);
    it is zero-masked for the first tile.  Delays must be <= 128 samples.
    """
    R = x_blk.shape[0]
    lane = lax.broadcasted_iota(jnp.int32, (R, _LANE), 1)
    sub = lax.broadcasted_iota(jnp.int32, (R, _LANE), 0)
    is_first = pl.program_id(0) == 0
    halo_row = jnp.where(is_first, jnp.zeros_like(halo_row), halo_row)
    # prev_rows[r] == folded-signal row (tile_base + r - 1): shared sublane
    # roll (XLU) + halo injection on row 0, instead of misaligned slice copies.
    prev_rows = jnp.where(sub == 0, halo_row, pltpu.roll(x_blk, shift=1, axis=0))
    dry = x_blk
    taps = []
    for d in delays:
        if d == 0:
            wet = dry
        else:
            cur = pltpu.roll(x_blk, shift=d, axis=1)
            prv = pltpu.roll(prev_rows, shift=d, axis=1)
            # Lanes l >= d come from the same row; lanes l < d wrap into the
            # previous row of the folded signal.
            wet = jnp.where(lane >= d, cur, prv)
        taps.append(mix * wet + (1.0 - mix) * dry)
    return taps


def _tap_max_kernel(x_ref, halo_ref, out_ref, *, mix, delays):
    """Pass 1: per-tile, per-tap abs-max partials.

    The max runs over the zero-padded range, which reproduces torch's per-tap
    max over the full T+d length (the pad contributes exact zeros)."""
    halo_row = halo_ref[_SUB - 1:_SUB, :]
    taps = _tile_taps(x_ref[...], halo_row, mix=mix, delays=delays)
    sub8 = lax.broadcasted_iota(jnp.int32, (_SUB, _LANE), 0)
    acc = jnp.zeros((_SUB, _LANE), jnp.float32)
    for i, tap in enumerate(taps):
        m = jnp.max(jnp.abs(tap), axis=1, keepdims=True)   # (R, 1)
        m = jnp.max(m, axis=0, keepdims=True)               # (1, 1)
        acc = jnp.where(sub8 == i, m, acc)                  # tap i -> sublane i
    out_ref[0] = acc


def _sum_max_kernel(x_ref, halo_ref, inv_ref, out_ref, *, mix, delays, T):
    """Pass 2: per-tile partial abs-max of the tap-normalized sum (t < T)."""
    j = pl.program_id(0)
    R = x_ref.shape[0]
    halo_row = halo_ref[_SUB - 1:_SUB, :]
    taps = _tile_taps(x_ref[...], halo_row, mix=mix, delays=delays)
    ssum = jnp.zeros((R, _LANE), jnp.float32)
    for i, tap in enumerate(taps):
        ssum = ssum + tap * inv_ref[i]          # 1/tap_max from SMEM (hoisted)
    sub = lax.broadcasted_iota(jnp.int32, (R, _LANE), 0)
    lane = lax.broadcasted_iota(jnp.int32, (R, _LANE), 1)
    t_idx = (j * R + sub) * _LANE + lane
    g = jnp.max(jnp.where(t_idx < T, jnp.abs(ssum), 0.0), axis=1, keepdims=True)
    g = jnp.max(g, axis=0, keepdims=True)
    sub8 = lax.broadcasted_iota(jnp.int32, (_SUB, _LANE), 0)
    out_ref[0] = jnp.where(sub8 == 0, g, 0.0)


def _render_kernel(x_ref, halo_ref, scale_ref, out_ref, *, mix, delays):
    """Pass 3: sum of taps scaled by (1/tap_max)*(1/global_max), lane-dense."""
    R = x_ref.shape[0]
    halo_row = halo_ref[_SUB - 1:_SUB, :]
    taps = _tile_taps(x_ref[...], halo_row, mix=mix, delays=delays)
    ssum = jnp.zeros((R, _LANE), jnp.float32)
    for i, tap in enumerate(taps):
        ssum = ssum + tap * scale_ref[i]        # pre-folded scales from SMEM
    out_ref[...] = ssum.astype(out_ref.dtype)


def delay_line_forward(x, *, mix=MIX, delay_samples=DELAY_SAMPLES,
                       max_tile_samples=None):
    """x: (1, T) float32 audio signal.  Returns (1, T) float32."""
    x = x.astype(jnp.float32)
    assert x.ndim == 2 and x.shape[0] == 1
    T = int(x.shape[-1])
    n_taps = len(delay_samples)
    d_max = max(delay_samples)
    assert 1 <= n_taps <= _SUB
    # Single 128-sample halo row covers delays up to 128 samples.
    # TODO(synk): delays > 128 samples need a multi-row halo block.
    assert 0 <= d_max <= _LANE

    vmem_limit = _vmem_limit_bytes()
    # Render pass holds ~2x input + 2x output tile buffers (double-buffered)
    # plus a handful of tile-sized temporaries -> budget ~1/12 of the limit
    # per tile buffer (~1M samples on v7x, ~2M on v5e/v6e).
    tile_cap = max(_MIN_TILE, ((vmem_limit // 12) // 4 // _MIN_TILE) * _MIN_TILE)
    if max_tile_samples is not None:
        tile_cap = max(_MIN_TILE,
                       min(tile_cap, (max_tile_samples // _MIN_TILE) * _MIN_TILE))

    need = T + d_max                      # torch's per-tap max runs over T + d
    tile = min(tile_cap, _round_up(need, _MIN_TILE))
    Tp = _round_up(need, tile)
    R = tile // _LANE                     # rows per tile (multiple of 8)
    R8 = R // _SUB
    Rp = Tp // _LANE
    n_tiles = Tp // tile

    # Zero-padded, sublane-folded copy of the signal: sample t -> (t//128, t%128).
    x2d = jnp.zeros((1, Tp), jnp.float32).at[:, :T].set(x).reshape(Rp, _LANE)

    main_spec = pl.BlockSpec((R, _LANE), lambda j: (j, 0))
    # Halo: the 8-row group that ends right before this tile (its last row
    # holds the previous 128 samples).  Clamped to block 0 and zero-masked
    # in-kernel for j == 0, so there is no carried state between tiles.
    halo_spec = pl.BlockSpec((_SUB, _LANE),
                             lambda j: (jnp.maximum(j * R8 - 1, 0), 0))
    part_spec = pl.BlockSpec((1, _SUB, _LANE), lambda j: (j, 0, 0))
    smem_spec = pl.BlockSpec(memory_space=pltpu.MemorySpace.SMEM)
    part_shape = jax.ShapeDtypeStruct((n_tiles, _SUB, _LANE), jnp.float32)
    cparams = pltpu.CompilerParams(dimension_semantics=("parallel",),
                                   vmem_limit_bytes=vmem_limit)
    delays = tuple(int(d) for d in delay_samples)

    # Pass 1: per-tile, per-tap abs-max partials -> reduced in the wrapper.
    tap_part = pl.pallas_call(
        partial(_tap_max_kernel, mix=float(mix), delays=delays),
        out_shape=part_shape,
        grid_spec=pltpu.PrefetchScalarGridSpec(
            num_scalar_prefetch=0, grid=(n_tiles,),
            in_specs=[main_spec, halo_spec],
            out_specs=part_spec),
        compiler_params=cparams,
    )(x2d, x2d)
    inv_tap = 1.0 / jnp.max(tap_part[:, :n_taps, 0], axis=0)       # (n_taps,)

    # Pass 2: per-tile partial abs-max of the tap-normalized sum (t < T only).
    sum_part = pl.pallas_call(
        partial(_sum_max_kernel, mix=float(mix), delays=delays, T=T),
        out_shape=part_shape,
        grid_spec=pltpu.PrefetchScalarGridSpec(
            num_scalar_prefetch=0, grid=(n_tiles,),
            in_specs=[main_spec, halo_spec, smem_spec],
            out_specs=part_spec),
        compiler_params=cparams,
    )(x2d, x2d, inv_tap)
    # Fold the global normalization into the per-tap scales (hoisted reciprocals).
    scales = inv_tap * (1.0 / jnp.max(sum_part[:, 0, 0]))           # (n_taps,)

    # Pass 3: render; lane-dense (R, 128) output blocks, truncated outside.
    out2d = pl.pallas_call(
        partial(_render_kernel, mix=float(mix), delays=delays),
        out_shape=jax.ShapeDtypeStruct((Rp, _LANE), jnp.float32),
        grid_spec=pltpu.PrefetchScalarGridSpec(
            num_scalar_prefetch=0, grid=(n_tiles,),
            in_specs=[main_spec, halo_spec, smem_spec],
            out_specs=pl.BlockSpec((R, _LANE), lambda j: (j, 0))),
        compiler_params=cparams,
    )(x2d, x2d, scales)

    return out2d.reshape(1, Tp)[:, :T]


def _reference_forward(x, mix, delay_samples):
    """Pure-JAX transliteration of the torch module (for verification)."""
    T = x.shape[-1]
    outs = []
    for d in delay_samples:
        z = jnp.zeros((1, d), x.dtype)
        dry = jnp.concatenate([x, z], axis=-1)
        wet = jnp.concatenate([z, x], axis=-1)
        o = wet * mix + dry * (1.0 - mix)
        o = o / jnp.max(jnp.abs(o))
        outs.append(o[:, :T])
    s = jnp.stack(outs).sum(axis=0)
    return s / jnp.max(jnp.abs(s))


if __name__ == "__main__":
    key = jax.random.PRNGKey(0)
    k1, k2 = jax.random.split(key)

    # Primary small test: single time tile.
    T = 256
    x = jax.random.normal(k1, (1, T), dtype=jnp.float32)
    ref = jax.block_until_ready(_reference_forward(x, MIX, DELAY_SAMPLES))
    out = jax.block_until_ready(delay_line_forward(x))
    np.testing.assert_allclose(np.asarray(out), np.asarray(ref),
                               rtol=1e-5, atol=1e-5)
    assert out.shape == (1, T) and out.dtype == jnp.float32

    # Forced multi-tile path: exercises the overlapping halo block between
    # tiles and the t < T masking of the global max.
    T2 = 2500
    x2 = jax.random.normal(k2, (1, T2), dtype=jnp.float32)
    ref2 = jax.block_until_ready(_reference_forward(x2, MIX, DELAY_SAMPLES))
    out2 = jax.block_until_ready(delay_line_forward(x2, max_tile_samples=1024))
    np.testing.assert_allclose(np.asarray(out2), np.asarray(ref2),
                               rtol=1e-5, atol=1e-5)

    print("KERNEL_OK")
</pallas_src>

<mosaic_0001>
module attributes {stable_mosaic.version = 11 : i64} {
  func.func @_tap_max_kernel(%arg0: i32, %arg1: memref<8x128xf32, #tpu.memory_space<vmem>>, %arg2: memref<8x128xf32, #tpu.memory_space<vmem>>, %arg3: memref<1x8x128xf32, #tpu.memory_space<vmem>>) attributes {dimension_semantics = [#tpu.dimension_semantics<parallel>], iteration_bounds = array<i64: 1>, scalar_prefetch = 0 : i64, scratch_operands = 0 : i64, tpu.core_type = #tpu.core_type<tc>, window_params = [{transform_indices = @transform_0, window_bounds = array<i64: 8, 128>}, {transform_indices = @transform_1, window_bounds = array<i64: 8, 128>}, {transform_indices = @transform_2, window_bounds = array<i64: 1, 8, 128>}]} {
    %c7 = arith.constant 7 : index
    %c0 = arith.constant 0 : index
    %0 = vector.load %arg2[%c7, %c0] : memref<8x128xf32, #tpu.memory_space<vmem>>, vector<1x128xf32>
    %c0_0 = arith.constant 0 : index
    %c0_1 = arith.constant 0 : index
    %1 = vector.load %arg1[%c0_0, %c0_1] : memref<8x128xf32, #tpu.memory_space<vmem>>, vector<8x128xf32>
    %2 = tpu.iota {dimensions = array<i32: 1>} : vector<8x128xi32>
    %3 = tpu.iota {dimensions = array<i32: 0>} : vector<8x128xi32>
    %c0_i32 = arith.constant 0 : i32
    %4 = arith.cmpi eq, %arg0, %c0_i32 : i32
    %cst = arith.constant 0.000000e+00 : f32
    %5 = vector.broadcast %cst : f32 to vector<1x128xf32>
    %6 = arith.select %4, %5, %0 : vector<1x128xf32>
    %c0_i32_2 = arith.constant 0 : i32
    %7 = vector.broadcast %c0_i32_2 : i32 to vector<8x128xi32>
    %8 = arith.cmpi eq, %3, %7 : vector<8x128xi32>
    %c1_i32 = arith.constant 1 : i32
    %9 = tpu.dynamic_rotate %1 by %c1_i32 dim 0 : vector<8x128xf32>, i32 -> vector<8x128xf32>
    %10 = vector.shape_cast %6 : vector<1x128xf32> to vector<1x128xf32>
    %11 = vector.broadcast %10 : vector<1x128xf32> to vector<8x128xf32>
    %12 = arith.select %8, %11, %9 : vector<8x128xi1>, vector<8x128xf32>
    %c3_i32 = arith.constant 3 : i32
    %13 = tpu.dynamic_rotate %1 by %c3_i32 dim 1 : vector<8x128xf32>, i32 -> vector<8x128xf32>
    %c3_i32_3 = arith.constant 3 : i32
    %14 = tpu.dynamic_rotate %12 by %c3_i32_3 dim 1 : vector<8x128xf32>, i32 -> vector<8x128xf32>
    %c3_i32_4 = arith.constant 3 : i32
    %15 = vector.broadcast %c3_i32_4 : i32 to vector<8x128xi32>
    %16 = arith.cmpi sge, %2, %15 : vector<8x128xi32>
    %17 = arith.select %16, %13, %14 : vector<8x128xi1>, vector<8x128xf32>
    %cst_5 = arith.constant 3.500000e-01 : f32
    %18 = vector.broadcast %cst_5 : f32 to vector<8x128xf32>
    %19 = arith.mulf %18, %17 : vector<8x128xf32>
    %cst_6 = arith.constant 6.500000e-01 : f32
    %20 = vector.broadcast %cst_6 : f32 to vector<8x128xf32>
    %21 = arith.mulf %20, %1 : vector<8x128xf32>
    %22 = arith.addf %19, %21 : vector<8x128xf32>
    %c5_i32 = arith.constant 5 : i32
    %23 = tpu.dynamic_rotate %1 by %c5_i32 dim 1 : vector<8x128xf32>, i32 -> vector<8x128xf32>
    %c5_i32_7 = arith.constant 5 : i32
    %24 = tpu.dynamic_rotate %12 by %c5_i32_7 dim 1 : vector<8x128xf32>, i32 -> vector<8x128xf32>
    %c5_i32_8 = arith.constant 5 : i32
    %25 = vector.broadcast %c5_i32_8 : i32 to vector<8x128xi32>
    %26 = arith.cmpi sge, %2, %25 : vector<8x128xi32>
    %27 = arith.select %26, %23, %24 : vector<8x128xi1>, vector<8x128xf32>
    %cst_9 = arith.constant 3.500000e-01 : f32
    %28 = vector.broadcast %cst_9 : f32 to vector<8x128xf32>
    %29 = arith.mulf %28, %27 : vector<8x128xf32>
    %cst_10 = arith.constant 6.500000e-01 : f32
    %30 = vector.broadcast %cst_10 : f32 to vector<8x128xf32>
    %31 = arith.mulf %30, %1 : vector<8x128xf32>
    %32 = arith.addf %29, %31 : vector<8x128xf32>
    %c7_i32 = arith.constant 7 : i32
    %33 = tpu.dynamic_rotate %1 by %c7_i32 dim 1 : vector<8x128xf32>, i32 -> vector<8x128xf32>
    %c7_i32_11 = arith.constant 7 : i32
    %34 = tpu.dynamic_rotate %12 by %c7_i32_11 dim 1 : vector<8x128xf32>, i32 -> vector<8x128xf32>
    %c7_i32_12 = arith.constant 7 : i32
    %35 = vector.broadcast %c7_i32_12 : i32 to vector<8x128xi32>
    %36 = arith.cmpi sge, %2, %35 : vector<8x128xi32>
    %37 = arith.select %36, %33, %34 : vector<8x128xi1>, vector<8x128xf32>
    %cst_13 = arith.constant 3.500000e-01 : f32
    %38 = vector.broadcast %cst_13 : f32 to vector<8x128xf32>
    %39 = arith.mulf %38, %37 : vector<8x128xf32>
    %cst_14 = arith.constant 6.500000e-01 : f32
    %40 = vector.broadcast %cst_14 : f32 to vector<8x128xf32>
    %41 = arith.mulf %40, %1 : vector<8x128xf32>
    %42 = arith.addf %39, %41 : vector<8x128xf32>
    %43 = tpu.iota {dimensions = array<i32: 0>} : vector<8x128xi32>
    %cst_15 = arith.constant 0.000000e+00 : f32
    %44 = vector.broadcast %cst_15 : f32 to vector<8x128xf32>
    %45 = math.absf %22 : vector<8x128xf32>
    %cst_16 = arith.constant dense<0xFF800000> : vector<8xf32>
    %46 = vector.multi_reduction <maximumf>, %45, %cst_16 [1] : vector<8x128xf32> to vector<8xf32>
    %47 = vector.shape_cast %46 : vector<8xf32> to vector<8x1xf32>
    %cst_17 = arith.constant dense<0xFF800000> : vector<1xf32>
    %48 = vector.multi_reduction <maximumf>, %47, %cst_17 [0] : vector<8x1xf32> to vector<1xf32>
    %49 = vector.shape_cast %48 : vector<1xf32> to vector<1x1xf32>
    %c0_i32_18 = arith.constant 0 : i32
    %50 = vector.broadcast %c0_i32_18 : i32 to vector<8x128xi32>
    %51 = arith.cmpi eq, %43, %50 : vector<8x128xi32>
    %52 = vector.shape_cast %49 : vector<1x1xf32> to vector<1x1xf32>
    %53 = vector.broadcast %52 : vector<1x1xf32> to vector<8x128xf32>
    %54 = arith.select %51, %53, %44 : vector<8x128xi1>, vector<8x128xf32>
    %55 = math.absf %32 : vector<8x128xf32>
    %cst_19 = arith.constant dense<0xFF800000> : vector<8xf32>
    %56 = vector.multi_reduction <maximumf>, %55, %cst_19 [1] : vector<8x128xf32> to vector<8xf32>
    %57 = vector.shape_cast %56 : vector<8xf32> to vector<8x1xf32>
    %cst_20 = arith.constant dense<0xFF800000> : vector<1xf32>
    %58 = vector.multi_reduction <maximumf>, %57, %cst_20 [0] : vector<8x1xf32> to vector<1xf32>
    %59 = vector.shape_cast %58 : vector<1xf32> to vector<1x1xf32>
    %c1_i32_21 = arith.constant 1 : i32
    %60 = vector.broadcast %c1_i32_21 : i32 to vector<8x128xi32>
    %61 = arith.cmpi eq, %43, %60 : vector<8x128xi32>
    %62 = vector.shape_cast %59 : vector<1x1xf32> to vector<1x1xf32>
    %63 = vector.broadcast %62 : vector<1x1xf32> to vector<8x128xf32>
    %64 = arith.select %61, %63, %54 : vector<8x128xi1>, vector<8x128xf32>
    %65 = math.absf %42 : vector<8x128xf32>
    %cst_22 = arith.constant dense<0xFF800000> : vector<8xf32>
    %66 = vector.multi_reduction <maximumf>, %65, %cst_22 [1] : vector<8x128xf32> to vector<8xf32>
    %67 = vector.shape_cast %66 : vector<8xf32> to vector<8x1xf32>
    %cst_23 = arith.constant dense<0xFF800000> : vector<1xf32>
    %68 = vector.multi_reduction <maximumf>, %67, %cst_23 [0] : vector<8x1xf32> to vector<1xf32>
    %69 = vector.shape_cast %68 : vector<1xf32> to vector<1x1xf32>
    %c2_i32 = arith.constant 2 : i32
    %70 = vector.broadcast %c2_i32 : i32 to vector<8x128xi32>
    %71 = arith.cmpi eq, %43, %70 : vector<8x128xi32>
    %72 = vector.shape_cast %69 : vector<1x1xf32> to vector<1x1xf32>
    %73 = vector.broadcast %72 : vector<1x1xf32> to vector<8x128xf32>
    %74 = arith.select %71, %73, %64 : vector<8x128xi1>, vector<8x128xf32>
    %c0_24 = arith.constant 0 : index
    %c0_25 = arith.constant 0 : index
    %c0_26 = arith.constant 0 : index
    %75 = vector.load %arg3[%c0_24, %c0_25, %c0_26] : memref<1x8x128xf32, #tpu.memory_space<vmem>>, vector<1x8x128xf32>
    %76 = vector.shape_cast %75 : vector<1x8x128xf32> to vector<8x128xf32>
    %77 = vector.shape_cast %74 : vector<8x128xf32> to vector<1x8x128xf32>
    tpu.vector_store %arg3[%c0_24, %c0_25, %c0_26], %77 {strides = array<i32>} : memref<1x8x128xf32, #tpu.memory_space<vmem>>, vector<1x8x128xf32>,
    return
  }
  func.func @transform_0(%arg0: i32) -> (i32, i32) {
    %c0_i32 = arith.constant 0 : i32
    %c0_i32_0 = arith.constant 0 : i32
    return %arg0, %c0_i32 : i32, i32
  }
  func.func @transform_1(%arg0: i32) -> (i32, i32) {
    %c1_i32 = arith.constant 1 : i32
    %0 = arith.muli %arg0, %c1_i32 : i32
    %c1_i32_0 = arith.constant 1 : i32
    %1 = arith.subi %0, %c1_i32_0 : i32
    %c0_i32 = arith.constant 0 : i32
    %2 = arith.maxsi %1, %c0_i32 : i32
    %c0_i32_1 = arith.constant 0 : i32
    %c0_i32_2 = arith.constant 0 : i32
    return %2, %c0_i32_1 : i32, i32
  }
  func.func @transform_2(%arg0: i32) -> (i32, i32, i32) {
    %c0_i32 = arith.constant 0 : i32
    %c0_i32_0 = arith.constant 0 : i32
    %c0_i32_1 = arith.constant 0 : i32
    return %arg0, %c0_i32, %c0_i32_0 : i32, i32, i32
  }
}

</mosaic_0001>

<llo_original>
// kernel: tpu_custom_call.1
$region0: #{tpu_custom_call.1}
  #allocation0 [shape = 'u32[]', space=smem, size = 0x4, offset = 0x4, fixed_abs, tag = 'smem constant byte address 0x4 - core index']
  #allocation1 [shape = 'u32[144,128]{1,0:T(1,128)}', space=vmem, size = 0x12000, scoped, tag = 'internal scratch']
  %s0 = inlined_call_operand.hbm [shape: f32[8,128], index: 0, kind: input, shape index: {}]
  %s1 = inlined_call_operand.hbm [shape: f32[8,128], index: 1, kind: input, shape index: {}]
  %s2 = inlined_call_operand.hbm [shape: f32[1,8,128], index: 2, kind: output, shape index: {}]
  %s3 = sld [smem:[#allocation0]]
  $region26: #{tpu_custom_call.1} parent=0
    _
  %s5 = ssub.s32 1, %s3
  %s6 = scalar_select 0, %s5, %s3
  $region1: #{tpu_custom_call.1} parent=0
    #allocation2 [shape = 'u8[4096]{0}', space=vmem, size = 0x1000, scoped, tag = 'input window, operand 0, single buffered']
    #allocation3 [shape = 's32[1]{0}', space=sflag, size = 0x4, scoped, tag = 'scoped memory for tpu_custom_call.1']
    #allocation4 [shape = 's32[1]{0}', space=sflag, size = 0x4, scoped, tag = 'scoped memory for tpu_custom_call.1']
    #allocation5 [shape = 'u8[4096]{0}', space=vmem, size = 0x1000, scoped, tag = 'input window, operand 1, single buffered']
    #allocation6 [shape = 's32[1]{0}', space=sflag, size = 0x4, scoped, tag = 'scoped memory for tpu_custom_call.1']
    #allocation7 [shape = 'u8[4096]{0}', space=vmem, size = 0x1000, scoped, tag = 'output window, operand 0, single buffered']
    %7 = vsyncpa [#allocation3], 0
    %8 = vsyncpa [#allocation6], 0
    %9 = vsyncpa [#allocation4], 0
    // Predicated region
    $region2: #{tpu_custom_call.1} parent=1 // pred_check
      _
    $region3: #{tpu_custom_call.1} parent=1 // pred_check_branch
      %11 = sbr.rel (0) target = $region5
    $region4: #{tpu_custom_call.1} parent=1 // pred_region
      %s13 = ssub.s32 128, 128
      %14 = vsyncadd [#allocation3], %s13
      %s16 = sshll.u32 [#allocation2], 4
      %s17 = int_to_ptr.vmem [resolvable:$true] %s16
      %19 = dma.hbm_to_vmem [thread:$0]  %s0, 128, %s17, [#allocation3]
    $region5: #{tpu_custom_call.1} parent=1 // pred_fallthru
      _
    // Predicated region
    $region6: #{tpu_custom_call.1} parent=1 // pred_check
      _
    $region7: #{tpu_custom_call.1} parent=1 // pred_check_branch
      %21 = sbr.rel (0) target = $region9
    $region8: #{tpu_custom_call.1} parent=1 // pred_region
      %s22 = ssub.s32 0, 1
      %p23 = scmp.gt.s32.totalorder %s22, 0
      %s24 = scalar_select %p23, %s22, 0
      %s26 = ssub.s32 128, 128
      %27 = vsyncadd [#allocation6], %s26
      %s28 = smul.addr %s24, 128
      %s29 = scalar_lea.hbm %s1, %s28
      %s31 = sshll.u32 [#allocation5], 4
      %s32 = int_to_ptr.vmem [resolvable:$true] %s31
      %34 = dma.hbm_to_vmem [thread:$0]  %s29, 128, %s32, [#allocation6]
    $region9: #{tpu_custom_call.1} parent=1 // pred_fallthru
      _
    // Predicated region
    $region10: #{tpu_custom_call.1} parent=1 // pred_check
      _
    $region11: #{tpu_custom_call.1} parent=1 // pred_check_branch
      %36 = sbr.rel (0) target = $region13
    $region12: #{tpu_custom_call.1} parent=1 // pred_region
      %37 = dma.done [#allocation3], 128
    $region13: #{tpu_custom_call.1} parent=1 // pred_fallthru
      _
    // Predicated region
    $region14: #{tpu_custom_call.1} parent=1 // pred_check
      _
    $region15: #{tpu_custom_call.1} parent=1 // pred_check_branch
      %39 = sbr.rel (0) target = $region17
    $region16: #{tpu_custom_call.1} parent=1 // pred_region
      %40 = dma.done [#allocation6], 128
    $region17: #{tpu_custom_call.1} parent=1 // pred_fallthru
      _
    %s41 = ssub.s32 0, 1
    %p42 = scmp.gt.s32.totalorder %s41, 0
    %s43 = scalar_select %p42, %s41, 0
    %v44 = vld [vmem:[#allocation5 + $0x7] sm:$0x1]
    %v45 = vld [vmem:[#allocation2] sm:$0xff]
    %v46 = vlaneseq
    %v47 = vand.u32 %v46, 127
    %v48 = vlaneseq
    %v49 = vshrl.u32 %v48, 7
    %p50 = scmp.eq.s32.totalorder 0, 0
    %s51 = scalar_select %p50, 1, 0
    %v52 = vstv %s51
    %vm53 = vcmp.eq.s32.totalorder %v52, 1
    %v54 = vsel %vm53, 0.0, %v44
    %vm55 = vcmp.eq.s32.totalorder %v49, 0
    %v56 = vrot.slane %v45, 7
    %v57 = vlaneseq
    %v58 = vshrl.u32 %v57, 7
    %v59 = vsub.s32 0, %v58
    %v60 = vrot.slane %v54, %v59
    %v61 = vsel %vm55, %v60, %v56
    %62 = vrot.lane.b32.xlu0 %v45, 3
    %v63 = vpop.permute.xlu0 %62
    %64 = vrot.lane.b32.xlu0 %v61, 3
    %v65 = vpop.permute.xlu0 %64
    %vm66 = vcmp.ge.s32.totalorder %v47, 3
    %v67 = vsel %vm66, %v63, %v65
    %v68 = vmul.f32 %v67, 0.35
    %v69 = vmul.f32 %v45, 0.65
    %v70 = vadd.f32 %v68, %v69
    %71 = vrot.lane.b32.xlu0 %v45, 5
    %v72 = vpop.permute.xlu0 %71
    %73 = vrot.lane.b32.xlu0 %v61, 5
    %v74 = vpop.permute.xlu0 %73
    %vm75 = vcmp.ge.s32.totalorder %v47, 5
    %v76 = vsel %vm75, %v72, %v74
    %v77 = vmul.f32 %v76, 0.35
    %v78 = vadd.f32 %v77, %v69
    %79 = vrot.lane.b32.xlu0 %v45, 7
    %v80 = vpop.permute.xlu0 %79
    %81 = vrot.lane.b32.xlu0 %v61, 7
    %v82 = vpop.permute.xlu0 %81
    %vm83 = vcmp.ge.s32.totalorder %v47, 7
    %v84 = vsel %vm83, %v80, %v82
    %v85 = vmul.f32 %v84, 0.35
    %v86 = vadd.f32 %v85, %v69
    %v87 = vand.u32 2147483647, %v70
    %88 = vmax.xlane.f32.xlu0 %v87
    %v89 = vpop.xlane.xlu0 %88
    %v90 = vrot.slane %v89, 4
    %v91 = vmax.f32 %v89, %v90
    %v92 = vrot.slane %v91, 2
    %v93 = vmax.f32 %v91, %v92
    %v94 = vrot.slane %v93, 1
    %v95 = vmax.f32 %v93, %v94
    %v96 = vsel %vm55, %v95, 0.0
    %v97 = vand.u32 2147483647, %v78
    %98 = vmax.xlane.f32.xlu0 %v97
    %v99 = vpop.xlane.xlu0 %98
    %v100 = vrot.slane %v99, 4
    %v101 = vmax.f32 %v99, %v100
    %v102 = vrot.slane %v101, 2
    %v103 = vmax.f32 %v101, %v102
    %v104 = vrot.slane %v103, 1
    %v105 = vmax.f32 %v103, %v104
    %vm106 = vcmp.eq.s32.totalorder %v49, 1
    %v107 = vsel %vm106, %v105, %v96
    %v108 = vand.u32 2147483647, %v86
    %109 = vmax.xlane.f32.xlu0 %v108
    %v110 = vpop.xlane.xlu0 %109
    %v111 = vrot.slane %v110, 4
    %v112 = vmax.f32 %v110, %v111
    %v113 = vrot.slane %v112, 2
    %v114 = vmax.f32 %v112, %v113
    %v115 = vrot.slane %v114, 1
    %v116 = vmax.f32 %v114, %v115
    %vm117 = vcmp.eq.s32.totalorder %v49, 2
    %v118 = vsel %vm117, %v116, %v107
    %119 = vst [vmem:[#allocation7] sm:$0xff] %v118
    // Predicated region
    $region18: #{tpu_custom_call.1} parent=1 // pred_check
      _
    $region19: #{tpu_custom_call.1} parent=1 // pred_check_branch
      %121 = sbr.rel (0) target = $region21
    $region20: #{tpu_custom_call.1} parent=1 // pred_region
      %s123 = ssub.s32 128, 128
      %124 = vsyncadd [#allocation4], %s123
      %s126 = sshll.u32 [#allocation7], 4
      %s127 = int_to_ptr.vmem [resolvable:$true] %s126
      %129 = dma.vmem_to_hbm [thread:$0]  %s127, 128, %s2, [#allocation4]
    $region21: #{tpu_custom_call.1} parent=1 // pred_fallthru
      _
    // Predicated region
    $region22: #{tpu_custom_call.1} parent=1 // pred_check
      _
    $region23: #{tpu_custom_call.1} parent=1 // pred_check_branch
      %131 = sbr.rel (0) target = $region25
    $region24: #{tpu_custom_call.1} parent=1 // pred_region
      %132 = dma.done [#allocation4], 128
    $region25: #{tpu_custom_call.1} parent=1 // pred_fallthru
      _
    %133 = vsyncpa [#allocation3], 1
    %134 = vsyncpa [#allocation6], 1
    %135 = vsyncpa [#allocation4], 1

</llo_original>
